<compile_context>
chip_gen: v7x
topology: tpu7x:2x2x1
jax: 0.10.0
libtpu: 0.0.40
codegen_flags: <defaults>
</compile_context>

<pallas_src>
import jax
import jax.numpy as jnp
from jax.experimental import pallas as pl
from jax.experimental.pallas import tpu as pltpu

_SUBLANE = 8


def _round_up(x: int, m: int) -> int:
    return (x + m - 1) // m * m


def _prediction_kernel(y_ref, w0_ref, b0_ref, w1_ref, b1_ref, o_ref):
    # First linear + ReLU. MXU accumulates in f32; bias add / ReLU stay f32.
    h = jnp.dot(y_ref[...], w0_ref[...], preferred_element_type=jnp.float32)
    h = jnp.maximum(h + b0_ref[...].astype(jnp.float32), 0.0)
    # Second linear (no final nonlinearity, matching the PyTorch forward).
    # The f32 accumulator feeds the second dot directly (no lossy cast).
    out = jnp.dot(h, w1_ref[...], preferred_element_type=jnp.float32)
    out = out + b1_ref[...].astype(jnp.float32)
    o_ref[...] = out.astype(o_ref.dtype)


def prediction_forward(y, w0, b0, w1, b1, *,
                       small_batch_threshold=256, max_tile_b=1024):
    """y: (B, input_size); w0: (input_size, N); w1: (N, N); b0, b1: (N,) or (1, N)."""
    B, K = y.shape
    N = w0.shape[1]

    b0 = jnp.reshape(b0, (1, N))
    b1 = jnp.reshape(b1, (1, N))

    itemsize = jnp.dtype(y.dtype).itemsize
    cost = pl.CostEstimate(
        flops=2 * B * (K * N + N * N),
        transcendentals=0,
        bytes_accessed=(y.size + w0.size + b0.size + w1.size + b1.size
                        + B * N) * itemsize,
    )
    out_shape = jax.ShapeDtypeStruct((B, N), y.dtype)

    if B <= small_batch_threshold:
        # Small batch: single shot, no grid, everything resident in VMEM by
        # construction (whole-array block == full array dims, so no (8,128)
        # divisibility requirement and no padding needed).
        vmem = pl.BlockSpec(memory_space=pltpu.MemorySpace.VMEM)
        return pl.pallas_call(
            _prediction_kernel,
            out_shape=out_shape,
            in_specs=[vmem, vmem, vmem, vmem, vmem],
            out_specs=vmem,
            cost_estimate=cost,
        )(y, w0, b0, w1, b1)

    # Large batch: ragged batch tiling (no jnp.pad of y, no output slice pass).
    # >= 2 grid steps keeps both v7x TensorCores busy; tiles are capped at
    # max_tile_b rows to stay trivially inside scoped VMEM while amortizing the
    # per-step pipeline overhead.
    n_steps = max(2, pl.cdiv(B, max_tile_b))
    tile_b = _round_up(pl.cdiv(B, n_steps), _SUBLANE)
    grid = (pl.cdiv(B, tile_b),)

    return pl.pallas_call(
        _prediction_kernel,
        out_shape=out_shape,
        grid=grid,
        in_specs=[
            pl.BlockSpec((tile_b, K), lambda i: (i, 0)),
            # Constant index_maps: weights/biases are DMA'd once and stay
            # resident in VMEM across all batch tiles.
            pl.BlockSpec((K, N), lambda i: (0, 0)),
            pl.BlockSpec((1, N), lambda i: (0, 0)),
            pl.BlockSpec((N, N), lambda i: (0, 0)),
            pl.BlockSpec((1, N), lambda i: (0, 0)),
        ],
        out_specs=pl.BlockSpec((tile_b, N), lambda i: (i, 0)),
        compiler_params=pltpu.CompilerParams(
            dimension_semantics=("parallel",)),
        cost_estimate=cost,
    )(y, w0, b0, w1, b1)


def init_prediction_params(key, input_size, output_size, dtype=jnp.float32):
    """Deterministic init mimicking nn.Linear default (uniform +-1/sqrt(fan_in)).
    Weights stored as (in_features, out_features), i.e. PyTorch W transposed."""
    k0w, k0b, k1w, k1b = jax.random.split(key, 4)
    bound0 = 1.0 / jnp.sqrt(input_size)
    bound1 = 1.0 / jnp.sqrt(output_size)
    w0 = jax.random.uniform(k0w, (input_size, output_size), dtype, -bound0, bound0)
    b0 = jax.random.uniform(k0b, (1, output_size), dtype, -bound0, bound0)
    w1 = jax.random.uniform(k1w, (output_size, output_size), dtype, -bound1, bound1)
    b1 = jax.random.uniform(k1b, (1, output_size), dtype, -bound1, bound1)
    return w0, b0, w1, b1


if __name__ == "__main__":
    # Module-consistent shapes: input_size=32 (Nhidden+Naction), output_size=16
    # (Npred_out). Small batch exercises the no-grid VMEM-resident path; a
    # larger batch exercises the ragged, tiled "parallel" path with resident
    # weights and a partial last tile.
    INPUT_SIZE, OUTPUT_SIZE = 32, 16

    key = jax.random.PRNGKey(0)
    ky, kp, kz = jax.random.split(key, 3)
    w0, b0, w1, b1 = init_prediction_params(kp, INPUT_SIZE, OUTPUT_SIZE)

    def reference(x):
        return jnp.maximum(x @ w0 + b0, 0.0) @ w1 + b1

    # Small-batch (no-grid) path.
    B_small = 8
    y_small = jax.random.normal(ky, (B_small, INPUT_SIZE), dtype=jnp.float32)
    out_small = jax.block_until_ready(prediction_forward(y_small, w0, b0, w1, b1))
    assert out_small.shape == (B_small, OUTPUT_SIZE)
    assert jnp.allclose(out_small, reference(y_small), atol=1e-5, rtol=1e-5)

    # Batched (tiled grid) path: B > threshold, odd batch to exercise the
    # ragged last tile (out-of-bounds rows dropped on write).
    B_big = 600
    y_big = jax.random.normal(kz, (B_big, INPUT_SIZE), dtype=jnp.float32)
    out_big = jax.block_until_ready(prediction_forward(y_big, w0, b0, w1, b1))
    assert out_big.shape == (B_big, OUTPUT_SIZE)
    assert jnp.allclose(out_big, reference(y_big), atol=1e-5, rtol=1e-5)

    print("KERNEL_OK")
</pallas_src>

<mosaic_0001>
module attributes {stable_mosaic.version = 11 : i64} {
  func.func @_prediction_kernel(%arg0: memref<8x32xf32, #tpu.memory_space<vmem>>, %arg1: memref<32x16xf32, #tpu.memory_space<vmem>>, %arg2: memref<1x16xf32, #tpu.memory_space<vmem>>, %arg3: memref<16x16xf32, #tpu.memory_space<vmem>>, %arg4: memref<1x16xf32, #tpu.memory_space<vmem>>, %arg5: memref<8x16xf32, #tpu.memory_space<vmem>>) attributes {dimension_semantics = [], scalar_prefetch = 0 : i64, scratch_operands = 0 : i64, tpu.core_type = #tpu.core_type<tc>} {
    %c0 = arith.constant 0 : index
    %c0_0 = arith.constant 0 : index
    %0 = vector.load %arg0[%c0, %c0_0] : memref<8x32xf32, #tpu.memory_space<vmem>>, vector<8x32xf32>
    %c0_1 = arith.constant 0 : index
    %c0_2 = arith.constant 0 : index
    %1 = vector.load %arg1[%c0_1, %c0_2] : memref<32x16xf32, #tpu.memory_space<vmem>>, vector<32x16xf32>
    %cst = arith.constant dense<0.000000e+00> : vector<8x16xf32>
    %2 = tpu.matmul %0, %1, %cst {dimension_numbers = #tpu.dot_dimension_numbers<[1], [0], [0], [1], [0, 0, 1, 1], [], []>} : vector<8x32xf32>, vector<32x16xf32>, vector<8x16xf32> -> vector<8x16xf32>
    %c0_3 = arith.constant 0 : index
    %c0_4 = arith.constant 0 : index
    %3 = vector.load %arg2[%c0_3, %c0_4] : memref<1x16xf32, #tpu.memory_space<vmem>>, vector<1x16xf32>
    %4 = vector.broadcast %3 : vector<1x16xf32> to vector<8x16xf32>
    %5 = arith.addf %2, %4 : vector<8x16xf32>
    %cst_5 = arith.constant 0.000000e+00 : f32
    %6 = vector.broadcast %cst_5 : f32 to vector<8x16xf32>
    %7 = arith.maximumf %5, %6 : vector<8x16xf32>
    %c0_6 = arith.constant 0 : index
    %c0_7 = arith.constant 0 : index
    %8 = vector.load %arg3[%c0_6, %c0_7] : memref<16x16xf32, #tpu.memory_space<vmem>>, vector<16x16xf32>
    %cst_8 = arith.constant dense<0.000000e+00> : vector<8x16xf32>
    %9 = tpu.matmul %7, %8, %cst_8 {dimension_numbers = #tpu.dot_dimension_numbers<[1], [0], [0], [1], [0, 0, 1, 1], [], []>} : vector<8x16xf32>, vector<16x16xf32>, vector<8x16xf32> -> vector<8x16xf32>
    %c0_9 = arith.constant 0 : index
    %c0_10 = arith.constant 0 : index
    %10 = vector.load %arg4[%c0_9, %c0_10] : memref<1x16xf32, #tpu.memory_space<vmem>>, vector<1x16xf32>
    %11 = vector.broadcast %10 : vector<1x16xf32> to vector<8x16xf32>
    %12 = arith.addf %9, %11 : vector<8x16xf32>
    %c0_11 = arith.constant 0 : index
    %c0_12 = arith.constant 0 : index
    %13 = vector.load %arg5[%c0_11, %c0_12] : memref<8x16xf32, #tpu.memory_space<vmem>>, vector<8x16xf32>
    tpu.vector_store %arg5[%c0_11, %c0_12], %12 {strides = array<i32>} : memref<8x16xf32, #tpu.memory_space<vmem>>, vector<8x16xf32>,
    return
  }
}

</mosaic_0001>

<llo_original>
// kernel: tpu_custom_call.1
$region0: #{tpu_custom_call.1}
  #allocation0 [shape = 'u32[]', space=smem, size = 0x4, offset = 0x4, fixed_abs, tag = 'smem constant byte address 0x4 - core index']
  #allocation1 [shape = 'u32[144,128]{1,0:T(1,128)}', space=vmem, size = 0x12000, scoped, tag = 'internal scratch']
  %s0 = inlined_call_operand.vmem [shape: f32[8,32], index: 0, kind: input, shape index: {}]
  %s1 = inlined_call_operand.vmem [shape: f32[32,16], index: 1, kind: input, shape index: {}]
  %s2 = inlined_call_operand.vmem [shape: f32[1,16], index: 2, kind: input, shape index: {}]
  %s3 = inlined_call_operand.vmem [shape: f32[16,16], index: 3, kind: input, shape index: {}]
  %s4 = inlined_call_operand.vmem [shape: f32[1,16], index: 4, kind: input, shape index: {}]
  %s5 = inlined_call_operand.hbm [shape: f32[8,16], index: 5, kind: output, shape index: {}]
  %s6 = sld [smem:[#allocation0]]
  $region30: #{tpu_custom_call.1} parent=0
    _
  %s8 = ssub.s32 1, %s6
  %s9 = scalar_select 0, %s8, %s6
  $region1: #{tpu_custom_call.1} parent=0
    #allocation2 [shape = 'u8[4096]{0}', space=vmem, size = 0x1000, scoped, tag = 'output window, operand 0, single buffered']
    #allocation3 [shape = 's32[1]{0}', space=sflag, size = 0x4, scoped, tag = 'scoped memory for tpu_custom_call.1']
    %10 = vsyncpa [#allocation3], 0
    // Predicated region
    $region2: #{tpu_custom_call.1} parent=1 // pred_check
      _
    $region3: #{tpu_custom_call.1} parent=1 // pred_check_branch
      %12 = sbr.rel (0) target = $region5
    $region4: #{tpu_custom_call.1} parent=1 // pred_region
      _
    $region5: #{tpu_custom_call.1} parent=1 // pred_fallthru
      _
    // Predicated region
    $region6: #{tpu_custom_call.1} parent=1 // pred_check
      _
    $region7: #{tpu_custom_call.1} parent=1 // pred_check_branch
      %14 = sbr.rel (0) target = $region9
    $region8: #{tpu_custom_call.1} parent=1 // pred_region
      _
    $region9: #{tpu_custom_call.1} parent=1 // pred_fallthru
      _
    // Predicated region
    $region10: #{tpu_custom_call.1} parent=1 // pred_check
      _
    $region11: #{tpu_custom_call.1} parent=1 // pred_check_branch
      %16 = sbr.rel (0) target = $region13
    $region12: #{tpu_custom_call.1} parent=1 // pred_region
      _
    $region13: #{tpu_custom_call.1} parent=1 // pred_fallthru
      _
    // Predicated region
    $region14: #{tpu_custom_call.1} parent=1 // pred_check
      _
    $region15: #{tpu_custom_call.1} parent=1 // pred_check_branch
      %18 = sbr.rel (0) target = $region17
    $region16: #{tpu_custom_call.1} parent=1 // pred_region
      _
    $region17: #{tpu_custom_call.1} parent=1 // pred_fallthru
      _
    // Predicated region
    $region18: #{tpu_custom_call.1} parent=1 // pred_check
      _
    $region19: #{tpu_custom_call.1} parent=1 // pred_check_branch
      %20 = sbr.rel (0) target = $region21
    $region20: #{tpu_custom_call.1} parent=1 // pred_region
      _
    $region21: #{tpu_custom_call.1} parent=1 // pred_fallthru
      _
    %v21 = vld [vmem:[%s0] sm:$0xff]
    %v22 = vld [vmem:[%s1] sm:$0xff]
    %v23 = vld [vmem:[%s1 + $0x8] sm:$0xff]
    %v24 = vld [vmem:[%s1 + $0x10] sm:$0xff]
    %v25 = vld [vmem:[%s1 + $0x18] sm:$0xff]
    %v26 = vld [vmem:[%s2] sm:$0x1]
    %v28 = vlaneseq
    %v29 = vshrl.u32 %v28, 7
    %v30 = vsub.s32 0, %v29
    %v31 = vrot.slane %v26, %v30
    %vm33 = vcmask 261120
    %v35 = vsel %vm33, %v21, 0
    %37 = vmatprep.subr.mxu0 0.0
    %38 = vmatpush1.msra.mxu0 %v22
    %39 = vmatprep.subr.mxu0 0.0
    %40 = vmatpush1.msra.mxu0 %v23
    %41 = vmatprep.subr.mxu0 0.0
    %42 = vmatpush1.msra.mxu0 %v24
    %43 = vmatprep.subr.mxu0 0.0
    %44 = vmatpush1.msra.mxu0 %v25
    %45 = vmatprep.subr.mxu0 0.0
    %46 = vmatpush1.msra.mxu0 0.0
    %47 = vmatprep.subr.mxu0 0.0
    %48 = vmatpush1.msra.mxu0 0.0
    %49 = vmatprep.subr.mxu0 0.0
    %50 = vmatpush1.msra.mxu0 0.0
    %51 = vmatprep.subr.mxu0 0.0
    %52 = vmatpush1.msra.mxu0 0.0
    %53 = vmatprep.subr.mxu0 0.0
    %54 = vmatpush1.msra.mxu0 0.0
    %55 = vmatprep.subr.mxu0 0.0
    %56 = vmatpush1.msra.mxu0 0.0
    %57 = vmatprep.subr.mxu0 0.0
    %58 = vmatpush1.msra.mxu0 0.0
    %59 = vmatprep.subr.mxu0 0.0
    %60 = vmatpush1.msra.mxu0 0.0
    %61 = vmatprep.subr.mxu0 0.0
    %62 = vmatpush1.msra.mxu0 0.0
    %63 = vmatprep.subr.mxu0 0.0
    %64 = vmatpush1.msra.mxu0 0.0
    %65 = vmatprep.subr.mxu0 0.0
    %66 = vmatpush1.msra.mxu0 0.0
    %67 = vmatprep.subr.mxu0 0.0
    %68 = vmatpush1.msra.mxu0 0.0
    %69 = vmatprep.subr.mxu0 0.0
    %70 = vmatpush1.msra.mxu0 0.0
    %71 = vmatprep.subr.mxu0 0.0
    %72 = vmatpush1.msra.mxu0 0.0
    %73 = vmatprep.subr.mxu0 0.0
    %74 = vmatpush1.msra.mxu0 0.0
    %75 = vmatprep.subr.mxu0 0.0
    %76 = vmatpush1.msra.mxu0 0.0
    %77 = vmatprep.subr.mxu0 0.0
    %78 = vmatpush1.msra.mxu0 0.0
    %79 = vmatprep.subr.mxu0 0.0
    %80 = vmatpush1.msra.mxu0 0.0
    %81 = vmatprep.subr.mxu0 0.0
    %82 = vmatpush1.msra.mxu0 0.0
    %83 = vmatprep.subr.mxu0 0.0
    %84 = vmatpush1.msra.mxu0 0.0
    %85 = vmatprep.subr.mxu0 0.0
    %86 = vmatpush1.msra.mxu0 0.0
    %87 = vmatprep.subr.mxu0 0.0
    %88 = vmatpush1.msra.mxu0 0.0
    %89 = vmatprep.subr.mxu0 0.0
    %90 = vmatpush1.msra.mxu0 0.0
    %91 = vmatprep.subr.mxu0 0.0
    %92 = vmatpush1.msra.mxu0 0.0
    %93 = vmatprep.subr.mxu0 0.0
    %94 = vmatpush1.msra.mxu0 0.0
    %95 = vmatprep.subr.mxu0 0.0
    %96 = vmatpush1.msra.mxu0 0.0
    %97 = vmatprep.subr.mxu0 0.0
    %98 = vmatpush1.msra.mxu0 0.0
    %99 = vmatprep.subr.mxu0 0.0
    %100 = vmatpush1.msra.mxu0 0.0
    %101 = vmatprep.mubr.f32.mxu0 0.0
    %102 = vmatmul.mubr.f32.gmra.mrb[0].mxu0 %v35
    %v103 = vpop.f32.mrb[0].mxu0
    %v104 = vadd.f32 %v31, %v103
    %v105 = vpop.f32.mrb[0].mxu0
    %106 = vdwg.mxu0
    %v107 = vmax.f32 %v104, 0.0
    %v108 = vld [vmem:[%s3] sm:$0xff]
    %v109 = vld [vmem:[%s3 + $0x8] sm:$0xff]
    %v110 = vld [vmem:[%s4] sm:$0x1]
    %v112 = vlaneseq
    %v113 = vshrl.u32 %v112, 7
    %v114 = vsub.s32 0, %v113
    %v115 = vrot.slane %v110, %v114
    %vm117 = vcmask 130048
    %v119 = vsel %vm117, %v107, 0
    %121 = vmatprep.subr.mxu0 0.0
    %122 = vmatpush1.msra.mxu0 %v108
    %123 = vmatprep.subr.mxu0 0.0
    %124 = vmatpush1.msra.mxu0 %v109
    %125 = vmatprep.subr.mxu0 0.0
    %126 = vmatpush1.msra.mxu0 0.0
    %127 = vmatprep.subr.mxu0 0.0
    %128 = vmatpush1.msra.mxu0 0.0
    %129 = vmatprep.subr.mxu0 0.0
    %130 = vmatpush1.msra.mxu0 0.0
    %131 = vmatprep.subr.mxu0 0.0
    %132 = vmatpush1.msra.mxu0 0.0
    %133 = vmatprep.subr.mxu0 0.0
    %134 = vmatpush1.msra.mxu0 0.0
    %135 = vmatprep.subr.mxu0 0.0
    %136 = vmatpush1.msra.mxu0 0.0
    %137 = vmatprep.subr.mxu0 0.0
    %138 = vmatpush1.msra.mxu0 0.0
    %139 = vmatprep.subr.mxu0 0.0
    %140 = vmatpush1.msra.mxu0 0.0
    %141 = vmatprep.subr.mxu0 0.0
    %142 = vmatpush1.msra.mxu0 0.0
    %143 = vmatprep.subr.mxu0 0.0
    %144 = vmatpush1.msra.mxu0 0.0
    %145 = vmatprep.subr.mxu0 0.0
    %146 = vmatpush1.msra.mxu0 0.0
    %147 = vmatprep.subr.mxu0 0.0
    %148 = vmatpush1.msra.mxu0 0.0
    %149 = vmatprep.subr.mxu0 0.0
    %150 = vmatpush1.msra.mxu0 0.0
    %151 = vmatprep.subr.mxu0 0.0
    %152 = vmatpush1.msra.mxu0 0.0
    %153 = vmatprep.subr.mxu0 0.0
    %154 = vmatpush1.msra.mxu0 0.0
    %155 = vmatprep.subr.mxu0 0.0
    %156 = vmatpush1.msra.mxu0 0.0
    %157 = vmatprep.subr.mxu0 0.0
    %158 = vmatpush1.msra.mxu0 0.0
    %159 = vmatprep.subr.mxu0 0.0
    %160 = vmatpush1.msra.mxu0 0.0
    %161 = vmatprep.subr.mxu0 0.0
    %162 = vmatpush1.msra.mxu0 0.0
    %163 = vmatprep.subr.mxu0 0.0
    %164 = vmatpush1.msra.mxu0 0.0
    %165 = vmatprep.subr.mxu0 0.0
    %166 = vmatpush1.msra.mxu0 0.0
    %167 = vmatprep.subr.mxu0 0.0
    %168 = vmatpush1.msra.mxu0 0.0
    %169 = vmatprep.subr.mxu0 0.0
    %170 = vmatpush1.msra.mxu0 0.0
    %171 = vmatprep.subr.mxu0 0.0
    %172 = vmatpush1.msra.mxu0 0.0
    %173 = vmatprep.subr.mxu0 0.0
    %174 = vmatpush1.msra.mxu0 0.0
    %175 = vmatprep.subr.mxu0 0.0
    %176 = vmatpush1.msra.mxu0 0.0
    %177 = vmatprep.subr.mxu0 0.0
    %178 = vmatpush1.msra.mxu0 0.0
    %179 = vmatprep.subr.mxu0 0.0
    %180 = vmatpush1.msra.mxu0 0.0
    %181 = vmatprep.subr.mxu0 0.0
    %182 = vmatpush1.msra.mxu0 0.0
    %183 = vmatprep.subr.mxu0 0.0
    %184 = vmatpush1.msra.mxu0 0.0
    %185 = vmatprep.mubr.f32.mxu0 0.0
    %186 = vmatmul.mubr.f32.gmra.mrb[0].mxu0 %v119
    %v187 = vpop.f32.mrb[0].mxu0
    %v188 = vadd.f32 %v115, %v187
    %v189 = vpop.f32.mrb[0].mxu0
    %190 = vdwg.mxu0
    %191 = vst.msk [vmem:[#allocation2] sm:$0xff] %vm117, %v188
    // Predicated region
    $region22: #{tpu_custom_call.1} parent=1 // pred_check
      _
    $region23: #{tpu_custom_call.1} parent=1 // pred_check_branch
      %193 = sbr.rel (0) target = $region25
    $region24: #{tpu_custom_call.1} parent=1 // pred_region
      %s195 = ssub.s32 128, 128
      %196 = vsyncadd [#allocation3], %s195
      %s198 = sshll.u32 [#allocation2], 4
      %s199 = int_to_ptr.vmem [resolvable:$true] %s198
      %201 = dma.vmem_to_hbm [thread:$0]  %s199, 128, %s5, [#allocation3]
    $region25: #{tpu_custom_call.1} parent=1 // pred_fallthru
      _
    // Predicated region
    $region26: #{tpu_custom_call.1} parent=1 // pred_check
      _
    $region27: #{tpu_custom_call.1} parent=1 // pred_check_branch
      %203 = sbr.rel (0) target = $region29
    $region28: #{tpu_custom_call.1} parent=1 // pred_region
      %204 = dma.done [#allocation3], 128
    $region29: #{tpu_custom_call.1} parent=1 // pred_fallthru
      _
    %205 = vsyncpa [#allocation3], 1

</llo_original>
